<compile_context>
chip_gen: v6e
topology: v6e:2x2x1
jax: 0.10.0
libtpu: 0.0.40
codegen_flags: <defaults>
</compile_context>

<pallas_src>
import functools

import jax
import jax.numpy as jnp
from jax import lax
from jax.experimental import pallas as pl
from jax.experimental.pallas import tpu as pltpu

_LANE = 128

# Constants matching the PyTorch defaults used inside GetActivation.__init__
_PRELU_INIT = 0.5                                # nn.PReLU(init=0.5), num_parameters=1
_RRELU_SLOPE = (1.0 / 8.0 + 1.0 / 3.0) / 2.0     # nn.RReLU() eval mode: (lower+upper)/2
_LEAKY_SLOPE = 0.01                              # nn.LeakyReLU() default negative_slope
_SELU_ALPHA = 1.6732632423543772
_SELU_SCALE = 1.0507009873554805

_SUPPORTED = ('relu', 'prelu', 'rrelu', 'leakyrelu', 'gelu', 'selu', 'silu')
_TRANSCENDENTAL = frozenset({'gelu', 'selu', 'silu'})


def _apply_activation(x, name):
    """Elementwise activation, matching torch.nn semantics (eval mode)."""
    if name == 'relu':
        return jnp.maximum(x, 0)
    if name == 'prelu':
        # single learnable parameter (num_parameters=1, init=0.5), trace-time constant
        return jnp.where(x >= 0, x, jnp.asarray(_PRELU_INIT, x.dtype) * x)
    if name == 'rrelu':
        # deterministic eval-mode RReLU: fixed slope = (lower + upper) / 2
        return jnp.where(x >= 0, x, jnp.asarray(_RRELU_SLOPE, x.dtype) * x)
    if name == 'leakyrelu':
        return jnp.where(x >= 0, x, jnp.asarray(_LEAKY_SLOPE, x.dtype) * x)
    if name == 'gelu':
        # nn.GELU() default is the exact erf formulation
        inv_sqrt2 = jnp.asarray(0.7071067811865476, x.dtype)
        return 0.5 * x * (1.0 + lax.erf(x * inv_sqrt2))
    if name == 'selu':
        neg = _SELU_ALPHA * (jnp.exp(x) - 1.0)
        return _SELU_SCALE * (jnp.maximum(x, 0.0) + jnp.minimum(neg, 0.0))
    if name == 'silu':
        # exp + reciprocal ride the EUP slot instead of a VALU divide sequence
        return x * pl.reciprocal(1.0 + jnp.exp(-x), approx=False)
    raise NotImplementedError(f'Activation function {name} not implemented')


def _activation_kernel(x_ref, o_ref, *, name):
    x = x_ref[...]
    # v5e has no bf16 VPU/EUP path: compute transcendentals in f32, cast on store.
    if name in _TRANSCENDENTAL and x.dtype != jnp.float32:
        x = x.astype(jnp.float32)
    o_ref[...] = _apply_activation(x, name).astype(o_ref.dtype)


def get_activation(name: str):
    """Returns a callable mirroring GetActivation(name).forward."""
    if name not in _SUPPORTED:
        raise NotImplementedError(f'Activation function {name} not implemented')

    kernel = functools.partial(_activation_kernel, name=name)

    @jax.jit
    def forward(x):
        orig_shape = x.shape
        dtype = x.dtype
        n = x.size
        itemsize = jnp.dtype(dtype).itemsize

        # Lane-dense 2D slab. When n % 128 == 0 (typical NCHW) the reshape is a
        # free bitcast -> no extra HBM pass; otherwise pad the flat tail once.
        if n % _LANE == 0:
            rows = n // _LANE
            slab = x.reshape(rows, _LANE)
            padded = False
        else:
            rows = pl.cdiv(n, _LANE)
            slab = jnp.pad(x.reshape(-1), (0, rows * _LANE - n)).reshape(rows, _LANE)
            padded = True

        # ~2 MiB per-array block; with double-buffered in + out that is ~8 MiB of
        # VMEM, safely under the v5e 16 MiB scoped default (and v6e/v7x budgets).
        max_rows = (2 * 1024 * 1024) // (_LANE * itemsize)
        # Keep block rows a multiple of 32: satisfies (8,128)/(16,128)/(32,128)
        # sublane-packing minima for f32 / bf16 / int8-fp8 alike.
        max_rows = max(32, (max_rows // 32) * 32)
        if rows <= max_rows:
            block_rows = rows          # single full-extent block (always legal)
        else:
            block_rows = max_rows      # ragged last block handled by Pallas
        grid = (pl.cdiv(rows, block_rows),)

        cost = pl.CostEstimate(
            flops=4 * n,
            transcendentals=(n if name in _TRANSCENDENTAL else 0),
            bytes_accessed=2 * n * itemsize,
        )

        out = pl.pallas_call(
            kernel,
            out_shape=jax.ShapeDtypeStruct((rows, _LANE), dtype),
            grid=grid,
            in_specs=[pl.BlockSpec((block_rows, _LANE), lambda i: (i, 0))],
            out_specs=pl.BlockSpec((block_rows, _LANE), lambda i: (i, 0)),
            compiler_params=pltpu.CompilerParams(
                dimension_semantics=("parallel",),   # shards across v7x's 2 TCs
            ),
            cost_estimate=cost,
        )(slab)

        if padded:
            return out.reshape(-1)[:n].reshape(orig_shape)
        return out.reshape(orig_shape)

    return forward


def _reference(name, x):
    """Plain-JAX reference matching torch.nn eval-mode semantics (f32 math)."""
    x = x.astype(jnp.float32)
    if name == 'relu':
        return jnp.maximum(x, 0.0)
    if name == 'prelu':
        return jnp.where(x >= 0, x, _PRELU_INIT * x)
    if name == 'rrelu':
        return jnp.where(x >= 0, x, _RRELU_SLOPE * x)
    if name == 'leakyrelu':
        return jnp.where(x >= 0, x, _LEAKY_SLOPE * x)
    if name == 'gelu':
        return jax.nn.gelu(x, approximate=False)
    if name == 'selu':
        return jax.nn.selu(x)
    if name == 'silu':
        return jax.nn.silu(x)
    raise NotImplementedError(name)


if __name__ == "__main__":
    key = jax.random.PRNGKey(0)
    # NCHW input, small shapes: batch=2, channels=4, spatial=16x16 (n % 128 == 0)
    x_f32 = jax.random.normal(key, (2, 4, 16, 16), dtype=jnp.float32)
    # bf16 variant (exercises the sub-32-bit / upcast path)
    x_bf16 = x_f32.astype(jnp.bfloat16)
    # small non-128-divisible input (exercises the padded path)
    x_odd = jax.random.normal(jax.random.PRNGKey(1), (3, 5, 7, 11), dtype=jnp.float32)

    for name in _SUPPORTED:
        fwd = get_activation(name)

        y = jax.block_until_ready(fwd(x_f32))
        y_ref = _reference(name, x_f32)
        assert y.shape == x_f32.shape and y.dtype == x_f32.dtype
        assert jnp.allclose(y, y_ref, atol=1e-5, rtol=1e-5), f"f32 mismatch for {name}"

        y_odd = jax.block_until_ready(fwd(x_odd))
        y_odd_ref = _reference(name, x_odd)
        assert y_odd.shape == x_odd.shape and y_odd.dtype == x_odd.dtype
        assert jnp.allclose(y_odd, y_odd_ref, atol=1e-5, rtol=1e-5), \
            f"padded-path mismatch for {name}"

        yb = jax.block_until_ready(fwd(x_bf16))
        yb_ref = _reference(name, x_bf16).astype(jnp.bfloat16)
        assert yb.shape == x_bf16.shape and yb.dtype == x_bf16.dtype
        assert jnp.allclose(yb.astype(jnp.float32), yb_ref.astype(jnp.float32),
                            atol=2e-2, rtol=2e-2), f"bf16 mismatch for {name}"

    print("KERNEL_OK")
</pallas_src>

<mosaic_0001>
module attributes {stable_mosaic.version = 11 : i64} {
  func.func @_activation_kernel(%arg0: i32, %arg1: memref<16x128xf32, #tpu.memory_space<vmem>>, %arg2: memref<16x128xf32, #tpu.memory_space<vmem>>) attributes {dimension_semantics = [#tpu.dimension_semantics<parallel>], iteration_bounds = array<i64: 1>, scalar_prefetch = 0 : i64, scratch_operands = 0 : i64, tpu.core_type = #tpu.core_type<tc>, window_params = [{transform_indices = @transform_0, window_bounds = array<i64: 16, 128>}, {transform_indices = @transform_1, window_bounds = array<i64: 16, 128>}]} {
    %c0 = arith.constant 0 : index
    %c0_0 = arith.constant 0 : index
    %0 = vector.load %arg1[%c0, %c0_0] : memref<16x128xf32, #tpu.memory_space<vmem>>, vector<16x128xf32>
    %cst = arith.constant 0.000000e+00 : f32
    %1 = vector.broadcast %cst : f32 to vector<16x128xf32>
    %2 = arith.maximumf %0, %1 : vector<16x128xf32>
    %c0_1 = arith.constant 0 : index
    %c0_2 = arith.constant 0 : index
    %3 = vector.load %arg2[%c0_1, %c0_2] : memref<16x128xf32, #tpu.memory_space<vmem>>, vector<16x128xf32>
    tpu.vector_store %arg2[%c0_1, %c0_2], %2 {strides = array<i32>} : memref<16x128xf32, #tpu.memory_space<vmem>>, vector<16x128xf32>,
    return
  }
  func.func @transform_0(%arg0: i32) -> (i32, i32) {
    %c0_i32 = arith.constant 0 : i32
    %c0_i32_0 = arith.constant 0 : i32
    return %arg0, %c0_i32 : i32, i32
  }
  func.func @transform_1(%arg0: i32) -> (i32, i32) {
    %c0_i32 = arith.constant 0 : i32
    %c0_i32_0 = arith.constant 0 : i32
    return %arg0, %c0_i32 : i32, i32
  }
}

</mosaic_0001>

<llo_original>
// kernel: forward.1
$region0: #{forward.1}
  #allocation0 [shape = 'u32[]', space=smem, size = 0x4, offset = 0x4, fixed_abs, tag = 'smem constant byte address 0x4 - core index']
  #allocation1 [shape = 'u32[144,128]{1,0:T(1,128)}', space=vmem, size = 0x12000, scoped, tag = 'internal scratch']
  %s0 = inlined_call_operand.vmem [shape: f32[16,128], index: 0, kind: input, shape index: {}]
  %s1 = inlined_call_operand.vmem [shape: f32[16,128], index: 1, kind: output, shape index: {}]
  %s2 = sld [smem:[#allocation0]]
  $region14: #{forward.1} parent=0
    _
  %s4 = ssub.s32 1, %s2
  %s5 = scalar_select 0, %s4, %s2
  // Predicated region
  $region2: #{forward.1} parent=0 // pred_check
    _
  $region3: #{forward.1} parent=0 // pred_check_branch
    %7 = sbr.rel (0) target = $region5
  $region4: #{forward.1} parent=0 // pred_region
    _
  $region5: #{forward.1} parent=0 // pred_fallthru
    _
  %v8 = vld [vmem:[%s0] sm:$0xff]
  %v9 = vld [vmem:[%s0 + $0x8] sm:$0xff]
  %v10 = vmax.f32 %v8, 0.0
  %v11 = vmax.f32 %v9, 0.0
  %12 = vst [vmem:[%s1] sm:$0xff] %v10
  %13 = vst [vmem:[%s1 + $0x8] sm:$0xff] %v11
  // Predicated region
  $region6: #{forward.1} parent=0 // pred_check
    _
  $region7: #{forward.1} parent=0 // pred_check_branch
    %15 = sbr.rel (0) target = $region9
  $region8: #{forward.1} parent=0 // pred_region
    _
  $region9: #{forward.1} parent=0 // pred_fallthru
    _
  // Predicated region
  $region10: #{forward.1} parent=0 // pred_check
    _
  $region11: #{forward.1} parent=0 // pred_check_branch
    %17 = sbr.rel (0) target = $region13
  $region12: #{forward.1} parent=0 // pred_region
    _
  $region13: #{forward.1} parent=0 // pred_fallthru
    _

</llo_original>
